<compile_context>
chip_gen: v7x
topology: tpu7x:2x2x1
jax: 0.10.0
libtpu: 0.0.40
codegen_flags: <defaults>
</compile_context>

<pallas_src>
import functools

import jax
import jax.numpy as jnp
from jax.experimental import pallas as pl
from jax.experimental.pallas import tpu as pltpu


def _round_up(x, m):
    return ((x + m - 1) // m) * m


def _choose_tile(dim, want, align):
    """Largest multiple of `align` <= want that divides dim, else dim itself."""
    t = min(want, dim)
    t = (t // align) * align
    while t >= align:
        if dim % t == 0:
            return t
        t -= align
    return dim


def _mlp_kernel(x_ref, wgu_ref, wd_ref, o_ref, acc_ref, *, ti):
    # x_ref:   (tm, H)      tile of tokens (resident across the I axis)
    # wgu_ref: (H, 2*ti)    [gate tile | up tile] of the fused, transposed weight
    # wd_ref:  (ti, H)      down_proj weight tile (transposed)
    # o_ref:   (tm, H)      output tile (resident across the I axis)
    # acc_ref: (tm, H) f32  accumulator scratch
    j = pl.program_id(1)

    @pl.when(j == 0)
    def _init():
        acc_ref[...] = jnp.zeros_like(acc_ref)

    x = x_ref[...]
    # Fused gate+up projection: one MXU pass over a (H, 2*ti) weight tile.
    gu = jnp.dot(x, wgu_ref[...], preferred_element_type=jnp.float32)
    gate = gu[:, :ti]
    up = gu[:, ti:]
    h = (gate * jax.nn.sigmoid(gate)) * up          # SiLU * up, in f32 (EUP sigmoid)
    acc_ref[...] += jnp.dot(
        h.astype(wd_ref.dtype), wd_ref[...], preferred_element_type=jnp.float32
    )

    @pl.when(j == pl.num_programs(1) - 1)
    def _finalize():
        o_ref[...] = acc_ref[...].astype(o_ref.dtype)


def prepare_mlp_weights(wg, wu, wd, *, ti=512):
    """One-time weight layout prep (call OUTSIDE the per-step hot path).

    wg, wu: [I, H]; wd: [H, I]  (PyTorch nn.Linear [out_features, in_features]).
    Returns (wgu, wd_t, ti_eff):
      wgu:  [H, 2*I]  -- per-I-tile interleave of gate_proj.T and up_proj.T so
                         that block j along the last axis is [gate_j | up_j]
      wd_t: [I, H]    -- down_proj.T
      ti_eff: the intermediate-dim tile actually used (divides I, lane-aligned)
    """
    I, H = wg.shape
    ti_eff = _choose_tile(I, ti, 64)   # 2*ti multiple of 128 lanes (or full I)
    n = I // ti_eff
    wg_t = wg.T.reshape(H, n, ti_eff)
    wu_t = wu.T.reshape(H, n, ti_eff)
    wgu = jnp.concatenate([wg_t, wu_t], axis=-1).reshape(H, 2 * I)
    wd_t = wd.T
    return wgu, wd_t, ti_eff


@functools.partial(jax.jit, static_argnames=("tm", "ti"))
def llama_mlp(x, wgu, wd_t, *, tm=256, ti=512):
    """x: [B, S, H]; wgu: [H, 2*I], wd_t: [I, H] from prepare_mlp_weights."""
    B, S, H = x.shape
    I = wd_t.shape[0]
    assert wgu.shape == (H, 2 * I)
    assert I % ti == 0, "ti must divide I (pass the ti_eff from prepare_mlp_weights)"
    assert tm % 8 == 0, "tm must be a multiple of 8"

    M = B * S
    x2d = x.reshape(M, H)

    # Row tile: as large as requested for MXU utilisation, clamped + padded for
    # small / ragged token counts.
    tm_eff = min(tm, _round_up(M, 8))
    M_pad = _round_up(M, tm_eff)
    if M_pad != M:
        x2d = jnp.pad(x2d, ((0, M_pad - M), (0, 0)))

    wbytes = jnp.dtype(wgu.dtype).itemsize
    xbytes = jnp.dtype(x.dtype).itemsize
    # double-buffered streamed blocks + resident f32 accumulator + slack
    vmem = (
        2 * ((H * 2 * ti + ti * H) * wbytes + 2 * tm_eff * H * xbytes)
        + tm_eff * H * 4
        + (4 << 20)
    )
    vmem = int(min(max(vmem, 16 << 20), 96 << 20))

    cost = pl.CostEstimate(
        flops=6 * M * H * I + 3 * M * I,
        transcendentals=M * I,
        bytes_accessed=3 * H * I * wbytes + 2 * M * H * xbytes,
    )

    out = pl.pallas_call(
        functools.partial(_mlp_kernel, ti=ti),
        out_shape=jax.ShapeDtypeStruct((M_pad, H), x.dtype),
        grid_spec=pltpu.PrefetchScalarGridSpec(
            num_scalar_prefetch=0,
            grid=(M_pad // tm_eff, I // ti),
            in_specs=[
                pl.BlockSpec((tm_eff, H), lambda i, j: (i, 0)),   # token rows
                pl.BlockSpec((H, 2 * ti), lambda i, j: (0, j)),   # [gate|up] tile
                pl.BlockSpec((ti, H), lambda i, j: (j, 0)),       # down_proj tile
            ],
            out_specs=pl.BlockSpec((tm_eff, H), lambda i, j: (i, 0)),
            scratch_shapes=[pltpu.VMEM((tm_eff, H), jnp.float32)],
        ),
        compiler_params=pltpu.CompilerParams(
            dimension_semantics=("parallel", "arbitrary"),
            vmem_limit_bytes=vmem,
        ),
        cost_estimate=cost,
    )(x2d, wgu, wd_t)

    if M_pad != M:
        out = out[:M]
    return out.reshape(B, S, H)


def _reference(x, wg, wu, wd):
    g = jnp.einsum("bsh,ih->bsi", x, wg)
    u = jnp.einsum("bsh,ih->bsi", x, wu)
    h = (g * jax.nn.sigmoid(g)) * u
    return jnp.einsum("bsi,hi->bsh", h, wd)


if __name__ == "__main__":
    # Small, module-consistent shapes: batch=2, seq=8, hidden=32, intermediate=64.
    B, S, H, I = 2, 8, 32, 64
    key = jax.random.PRNGKey(0)
    kx, kg, ku, kd = jax.random.split(key, 4)

    x = jax.random.normal(kx, (B, S, H), dtype=jnp.float32)
    # nn.Linear weight layout = [out_features, in_features].
    wg = jax.random.normal(kg, (I, H), dtype=jnp.float32) * 0.05
    wu = jax.random.normal(ku, (I, H), dtype=jnp.float32) * 0.05
    wd = jax.random.normal(kd, (H, I), dtype=jnp.float32) * 0.05

    # One-time weight layout prep (outside the jitted hot path).
    wgu, wd_t, ti = prepare_mlp_weights(wg, wu, wd, ti=512)

    out = llama_mlp(x, wgu, wd_t, tm=256, ti=ti)
    out = jax.block_until_ready(out)

    ref = _reference(x, wg, wu, wd)
    assert out.shape == (B, S, H)
    assert jnp.allclose(out, ref, atol=1e-4, rtol=1e-4), "mismatch vs reference"

    print("KERNEL_OK")
</pallas_src>

<mosaic_0001>
module attributes {stable_mosaic.version = 11 : i64} {
  func.func @_mlp_kernel(%arg0: i32, %arg1: i32, %arg2: memref<16x32xf32, #tpu.memory_space<vmem>>, %arg3: memref<32x128xf32, #tpu.memory_space<vmem>>, %arg4: memref<64x32xf32, #tpu.memory_space<vmem>>, %arg5: memref<16x32xf32, #tpu.memory_space<vmem>>, %arg6: memref<16x32xf32, #tpu.memory_space<vmem>>) attributes {dimension_semantics = [#tpu.dimension_semantics<parallel>, #tpu.dimension_semantics<arbitrary>], iteration_bounds = array<i64: 1, 1>, scalar_prefetch = 0 : i64, scratch_operands = 1 : i64, tpu.core_type = #tpu.core_type<tc>, window_params = [{transform_indices = @transform_0, window_bounds = array<i64: 16, 32>}, {transform_indices = @transform_1, window_bounds = array<i64: 32, 128>}, {transform_indices = @transform_2, window_bounds = array<i64: 64, 32>}, {transform_indices = @transform_3, window_bounds = array<i64: 16, 32>}]} {
    %c0_i32 = arith.constant 0 : i32
    %0 = arith.cmpi eq, %arg1, %c0_i32 : i32
    %1 = arith.extui %0 : i1 to i32
    %c0_i32_0 = arith.constant 0 : i32
    %2 = arith.cmpi ne, %1, %c0_i32_0 : i32
    scf.if %2 {
      %cst_14 = arith.constant 0.000000e+00 : f32
      %23 = vector.broadcast %cst_14 : f32 to vector<16x32xf32>
      %c0_15 = arith.constant 0 : index
      %c0_16 = arith.constant 0 : index
      %24 = vector.load %arg6[%c0_15, %c0_16] : memref<16x32xf32, #tpu.memory_space<vmem>>, vector<16x32xf32>
      tpu.vector_store %arg6[%c0_15, %c0_16], %23 {strides = array<i32>} : memref<16x32xf32, #tpu.memory_space<vmem>>, vector<16x32xf32>,
    } else {
    }
    %c0 = arith.constant 0 : index
    %c0_1 = arith.constant 0 : index
    %3 = vector.load %arg2[%c0, %c0_1] : memref<16x32xf32, #tpu.memory_space<vmem>>, vector<16x32xf32>
    %c0_2 = arith.constant 0 : index
    %c0_3 = arith.constant 0 : index
    %4 = vector.load %arg3[%c0_2, %c0_3] : memref<32x128xf32, #tpu.memory_space<vmem>>, vector<32x128xf32>
    %cst = arith.constant dense<0.000000e+00> : vector<16x128xf32>
    %5 = tpu.matmul %3, %4, %cst {dimension_numbers = #tpu.dot_dimension_numbers<[1], [0], [0], [1], [0, 0, 1, 1], [], []>} : vector<16x32xf32>, vector<32x128xf32>, vector<16x128xf32> -> vector<16x128xf32>
    %6 = vector.extract_strided_slice %5 {offsets = [0, 0], sizes = [16, 64], strides = [1, 1]} : vector<16x128xf32> to vector<16x64xf32>
    %7 = vector.extract_strided_slice %5 {offsets = [0, 64], sizes = [16, 64], strides = [1, 1]} : vector<16x128xf32> to vector<16x64xf32>
    %8 = arith.negf %6 : vector<16x64xf32>
    %9 = math.exp %8 : vector<16x64xf32>
    %cst_4 = arith.constant 1.000000e+00 : f32
    %10 = vector.broadcast %cst_4 : f32 to vector<16x64xf32>
    %11 = arith.addf %10, %9 : vector<16x64xf32>
    %12 = arith.divf %10, %11 : vector<16x64xf32>
    %13 = arith.mulf %6, %12 : vector<16x64xf32>
    %14 = arith.mulf %13, %7 : vector<16x64xf32>
    %c0_5 = arith.constant 0 : index
    %c0_6 = arith.constant 0 : index
    %15 = vector.load %arg6[%c0_5, %c0_6] : memref<16x32xf32, #tpu.memory_space<vmem>>, vector<16x32xf32>
    %c0_7 = arith.constant 0 : index
    %c0_8 = arith.constant 0 : index
    %16 = vector.load %arg4[%c0_7, %c0_8] : memref<64x32xf32, #tpu.memory_space<vmem>>, vector<64x32xf32>
    %cst_9 = arith.constant dense<0.000000e+00> : vector<16x32xf32>
    %17 = tpu.matmul %14, %16, %cst_9 {dimension_numbers = #tpu.dot_dimension_numbers<[1], [0], [0], [1], [0, 0, 1, 1], [], []>} : vector<16x64xf32>, vector<64x32xf32>, vector<16x32xf32> -> vector<16x32xf32>
    %18 = arith.addf %15, %17 : vector<16x32xf32>
    %c0_10 = arith.constant 0 : index
    %c0_11 = arith.constant 0 : index
    %19 = vector.load %arg6[%c0_10, %c0_11] : memref<16x32xf32, #tpu.memory_space<vmem>>, vector<16x32xf32>
    tpu.vector_store %arg6[%c0_10, %c0_11], %18 {strides = array<i32>} : memref<16x32xf32, #tpu.memory_space<vmem>>, vector<16x32xf32>,
    %c0_i32_12 = arith.constant 0 : i32
    %20 = arith.cmpi eq, %arg1, %c0_i32_12 : i32
    %21 = arith.extui %20 : i1 to i32
    %c0_i32_13 = arith.constant 0 : i32
    %22 = arith.cmpi ne, %21, %c0_i32_13 : i32
    scf.if %22 {
      %c0_14 = arith.constant 0 : index
      %c0_15 = arith.constant 0 : index
      %23 = vector.load %arg6[%c0_14, %c0_15] : memref<16x32xf32, #tpu.memory_space<vmem>>, vector<16x32xf32>
      %c0_16 = arith.constant 0 : index
      %c0_17 = arith.constant 0 : index
      %24 = vector.load %arg5[%c0_16, %c0_17] : memref<16x32xf32, #tpu.memory_space<vmem>>, vector<16x32xf32>
      tpu.vector_store %arg5[%c0_16, %c0_17], %23 {strides = array<i32>} : memref<16x32xf32, #tpu.memory_space<vmem>>, vector<16x32xf32>,
    } else {
    }
    return
  }
  func.func @transform_0(%arg0: i32, %arg1: i32) -> (i32, i32) {
    %c0_i32 = arith.constant 0 : i32
    %c0_i32_0 = arith.constant 0 : i32
    return %arg0, %c0_i32 : i32, i32
  }
  func.func @transform_1(%arg0: i32, %arg1: i32) -> (i32, i32) {
    %c0_i32 = arith.constant 0 : i32
    %c0_i32_0 = arith.constant 0 : i32
    return %c0_i32, %arg1 : i32, i32
  }
  func.func @transform_2(%arg0: i32, %arg1: i32) -> (i32, i32) {
    %c0_i32 = arith.constant 0 : i32
    %c0_i32_0 = arith.constant 0 : i32
    return %arg1, %c0_i32 : i32, i32
  }
  func.func @transform_3(%arg0: i32, %arg1: i32) -> (i32, i32) {
    %c0_i32 = arith.constant 0 : i32
    %c0_i32_0 = arith.constant 0 : i32
    return %arg0, %c0_i32 : i32, i32
  }
}

</mosaic_0001>

<llo_original>
// kernel: llama_mlp.1
$region0: #{llama_mlp.1}
  #allocation0 [shape = 'u32[]', space=smem, size = 0x4, offset = 0x4, fixed_abs, tag = 'smem constant byte address 0x4 - core index']
  #allocation1 [shape = 'u32[144,128]{1,0:T(1,128)}', space=vmem, size = 0x12000, scoped, tag = 'internal scratch']
  #allocation2 [shape = 'f32[16,32]{1,0:T(8,128)}', space=vmem, size = 0x2000, scoped, tag = 'scratch operand']
  %s0 = inlined_call_operand.vmem [shape: f32[16,32], index: 0, kind: input, shape index: {}]
  %s1 = inlined_call_operand.vmem [shape: f32[32,128], index: 1, kind: input, shape index: {}]
  %s2 = inlined_call_operand.vmem [shape: f32[64,32], index: 2, kind: input, shape index: {}]
  %s3 = inlined_call_operand.hbm [shape: f32[16,32], index: 3, kind: output, shape index: {}]
  %s4 = sld [smem:[#allocation0]]
  $region30: #{llama_mlp.1} parent=0
    _
  %s6 = ssub.s32 1, %s4
  %s7 = scalar_select 0, %s6, %s4
  $region1: #{llama_mlp.1} parent=0
    #allocation3 [shape = 'u8[8192]{0}', space=vmem, size = 0x2000, scoped, tag = 'output window, operand 0, single buffered']
    #allocation4 [shape = 's32[1]{0}', space=sflag, size = 0x4, scoped, tag = 'scoped memory for llama_mlp.1']
    %8 = vsyncpa [#allocation4], 0
    // Predicated region
    $region2: #{llama_mlp.1} parent=1 // pred_check
      _
    $region3: #{llama_mlp.1} parent=1 // pred_check_branch
      %10 = sbr.rel (0) target = $region5
    $region4: #{llama_mlp.1} parent=1 // pred_region
      _
    $region5: #{llama_mlp.1} parent=1 // pred_fallthru
      _
    // Predicated region
    $region6: #{llama_mlp.1} parent=1 // pred_check
      _
    $region7: #{llama_mlp.1} parent=1 // pred_check_branch
      %12 = sbr.rel (0) target = $region9
    $region8: #{llama_mlp.1} parent=1 // pred_region
      _
    $region9: #{llama_mlp.1} parent=1 // pred_fallthru
      _
    // Predicated region
    $region10: #{llama_mlp.1} parent=1 // pred_check
      _
    $region11: #{llama_mlp.1} parent=1 // pred_check_branch
      %14 = sbr.rel (0) target = $region13
    $region12: #{llama_mlp.1} parent=1 // pred_region
      _
    $region13: #{llama_mlp.1} parent=1 // pred_fallthru
      _
    %p15 = scmp.eq.s32.totalorder 0, 0
    // Predicated region
    $region14: #{llama_mlp.1} parent=1 // pred_check
      %p16 = pneg %p15
    $region15: #{llama_mlp.1} parent=1 // pred_check_branch
      %18 = sbr.rel (%p16) target = $region17
    $region16: #{llama_mlp.1} parent=1 // pred_region
      %vm19 = vcmask 261120
      %20 = vst.msk [vmem:[#allocation2] sm:$0xff] %vm19, 0.0
      %21 = vst.msk [vmem:[#allocation2 + $0x8] sm:$0xff] %vm19, 0.0
    $region17: #{llama_mlp.1} parent=1 // pred_fallthru
      _
    %v22 = vld [vmem:[%s0] sm:$0xff]
    %v23 = vld [vmem:[%s0 + $0x8] sm:$0xff]
    %v24 = vld [vmem:[%s1] sm:$0xff]
    %v25 = vld [vmem:[%s1 + $0x8] sm:$0xff]
    %v26 = vld [vmem:[%s1 + $0x10] sm:$0xff]
    %v27 = vld [vmem:[%s1 + $0x18] sm:$0xff]
    %vm28 = vcmask 261120
    %v30 = vsel %vm28, %v22, 0
    %v33 = vsel %vm28, %v23, 0
    %35 = vmatprep.subr.mxu0 0.0
    %36 = vmatpush1.msra.mxu0 %v24
    %37 = vmatprep.subr.mxu0 0.0
    %38 = vmatpush1.msra.mxu0 %v25
    %39 = vmatprep.subr.mxu0 0.0
    %40 = vmatpush1.msra.mxu0 %v26
    %41 = vmatprep.subr.mxu0 0.0
    %42 = vmatpush1.msra.mxu0 %v27
    %43 = vmatprep.subr.mxu0 0.0
    %44 = vmatpush1.msra.mxu0 0.0
    %45 = vmatprep.subr.mxu0 0.0
    %46 = vmatpush1.msra.mxu0 0.0
    %47 = vmatprep.subr.mxu0 0.0
    %48 = vmatpush1.msra.mxu0 0.0
    %49 = vmatprep.subr.mxu0 0.0
    %50 = vmatpush1.msra.mxu0 0.0
    %51 = vmatprep.subr.mxu0 0.0
    %52 = vmatpush1.msra.mxu0 0.0
    %53 = vmatprep.subr.mxu0 0.0
    %54 = vmatpush1.msra.mxu0 0.0
    %55 = vmatprep.subr.mxu0 0.0
    %56 = vmatpush1.msra.mxu0 0.0
    %57 = vmatprep.subr.mxu0 0.0
    %58 = vmatpush1.msra.mxu0 0.0
    %59 = vmatprep.subr.mxu0 0.0
    %60 = vmatpush1.msra.mxu0 0.0
    %61 = vmatprep.subr.mxu0 0.0
    %62 = vmatpush1.msra.mxu0 0.0
    %63 = vmatprep.subr.mxu0 0.0
    %64 = vmatpush1.msra.mxu0 0.0
    %65 = vmatprep.subr.mxu0 0.0
    %66 = vmatpush1.msra.mxu0 0.0
    %67 = vmatprep.subr.mxu0 0.0
    %68 = vmatpush1.msra.mxu0 0.0
    %69 = vmatprep.subr.mxu0 0.0
    %70 = vmatpush1.msra.mxu0 0.0
    %71 = vmatprep.subr.mxu0 0.0
    %72 = vmatpush1.msra.mxu0 0.0
    %73 = vmatprep.subr.mxu0 0.0
    %74 = vmatpush1.msra.mxu0 0.0
    %75 = vmatprep.subr.mxu0 0.0
    %76 = vmatpush1.msra.mxu0 0.0
    %77 = vmatprep.subr.mxu0 0.0
    %78 = vmatpush1.msra.mxu0 0.0
    %79 = vmatprep.subr.mxu0 0.0
    %80 = vmatpush1.msra.mxu0 0.0
    %81 = vmatprep.subr.mxu0 0.0
    %82 = vmatpush1.msra.mxu0 0.0
    %83 = vmatprep.subr.mxu0 0.0
    %84 = vmatpush1.msra.mxu0 0.0
    %85 = vmatprep.subr.mxu0 0.0
    %86 = vmatpush1.msra.mxu0 0.0
    %87 = vmatprep.subr.mxu0 0.0
    %88 = vmatpush1.msra.mxu0 0.0
    %89 = vmatprep.subr.mxu0 0.0
    %90 = vmatpush1.msra.mxu0 0.0
    %91 = vmatprep.subr.mxu0 0.0
    %92 = vmatpush1.msra.mxu0 0.0
    %93 = vmatprep.subr.mxu0 0.0
    %94 = vmatpush1.msra.mxu0 0.0
    %95 = vmatprep.subr.mxu0 0.0
    %96 = vmatpush1.msra.mxu0 0.0
    %97 = vmatprep.subr.mxu0 0.0
    %98 = vmatpush1.msra.mxu0 0.0
    %99 = vmatprep.mubr.f32.mxu0 0.0
    %100 = vmatmul.mubr.f32.gmra.mrb[0].mxu0 %v30
    %v101 = vpop.f32.mrb[0].mxu0
    %v102 = vadd.f32 0.0, %v101
    %v103 = vpop.f32.mrb[0].mxu0
    %104 = vmatprep.mubr.f32.mxu0 0.0
    %105 = vmatmul.mubr.f32.gmra.mrb[0].mxu0 %v33
    %v106 = vpop.f32.mrb[0].mxu0
    %v107 = vadd.f32 0.0, %v106
    %v108 = vpop.f32.mrb[0].mxu0
    %109 = vdwg.mxu0
    %v110 = vxor.u32 %v102, 2147483648
    %v111 = vxor.u32 %v107, 2147483648
    %v112 = vmul.f32 %v110, 1.442695
    %v113 = vpow.pop %v112
    %v114 = vmul.f32 %v111, 1.442695
    %v115 = vpow.pop %v114
    %v116 = vadd.f32 %v113, 1.0
    %v117 = vadd.f32 %v115, 1.0
    %v118 = vrcp.pop %v116
    %v119 = vmul.f32 1.0, %v118
    %v120 = vrcp.pop %v117
    %v121 = vmul.f32 1.0, %v120
    %v122 = vmul.f32 %v102, %v119
    %v123 = vmul.f32 %v107, %v121
    %126 = vrot.lane.b32.xlu0 %v102, 64
    %v127 = vpop.permute.xlu0 %126
    %128 = vrot.lane.b32.xlu0 %v107, 64
    %v129 = vpop.permute.xlu0 %128
    %v132 = vmul.f32 %v122, %v127
    %v133 = vmul.f32 %v123, %v129
    %v134 = vld [vmem:[#allocation2] sm:$0xff]
    %v135 = vld [vmem:[#allocation2 + $0x8] sm:$0xff]
    %v136 = vld [vmem:[%s2] sm:$0xff]
    %v137 = vld [vmem:[%s2 + $0x8] sm:$0xff]
    %v138 = vld [vmem:[%s2 + $0x10] sm:$0xff]
    %v139 = vld [vmem:[%s2 + $0x18] sm:$0xff]
    %v140 = vld [vmem:[%s2 + $0x20] sm:$0xff]
    %v141 = vld [vmem:[%s2 + $0x28] sm:$0xff]
    %v142 = vld [vmem:[%s2 + $0x30] sm:$0xff]
    %v143 = vld [vmem:[%s2 + $0x38] sm:$0xff]
    %vm144 = vcmask 523264
    %v146 = vsel %vm144, %v132, 0
    %v149 = vsel %vm144, %v133, 0
    %151 = vmatprep.subr.mxu0 0.0
    %152 = vmatpush1.msra.mxu0 %v136
    %153 = vmatprep.subr.mxu0 0.0
    %154 = vmatpush1.msra.mxu0 %v137
    %155 = vmatprep.subr.mxu0 0.0
    %156 = vmatpush1.msra.mxu0 %v138
    %157 = vmatprep.subr.mxu0 0.0
    %158 = vmatpush1.msra.mxu0 %v139
    %159 = vmatprep.subr.mxu0 0.0
    %160 = vmatpush1.msra.mxu0 %v140
    %161 = vmatprep.subr.mxu0 0.0
    %162 = vmatpush1.msra.mxu0 %v141
    %163 = vmatprep.subr.mxu0 0.0
    %164 = vmatpush1.msra.mxu0 %v142
    %165 = vmatprep.subr.mxu0 0.0
    %166 = vmatpush1.msra.mxu0 %v143
    %167 = vmatprep.subr.mxu0 0.0
    %168 = vmatpush1.msra.mxu0 0.0
    %169 = vmatprep.subr.mxu0 0.0
    %170 = vmatpush1.msra.mxu0 0.0
    %171 = vmatprep.subr.mxu0 0.0
    %172 = vmatpush1.msra.mxu0 0.0
    %173 = vmatprep.subr.mxu0 0.0
    %174 = vmatpush1.msra.mxu0 0.0
    %175 = vmatprep.subr.mxu0 0.0
    %176 = vmatpush1.msra.mxu0 0.0
    %177 = vmatprep.subr.mxu0 0.0
    %178 = vmatpush1.msra.mxu0 0.0
    %179 = vmatprep.subr.mxu0 0.0
    %180 = vmatpush1.msra.mxu0 0.0
    %181 = vmatprep.subr.mxu0 0.0
    %182 = vmatpush1.msra.mxu0 0.0
    %183 = vmatprep.subr.mxu0 0.0
    %184 = vmatpush1.msra.mxu0 0.0
    %185 = vmatprep.subr.mxu0 0.0
    %186 = vmatpush1.msra.mxu0 0.0
    %187 = vmatprep.subr.mxu0 0.0
    %188 = vmatpush1.msra.mxu0 0.0
    %189 = vmatprep.subr.mxu0 0.0
    %190 = vmatpush1.msra.mxu0 0.0
    %191 = vmatprep.subr.mxu0 0.0
    %192 = vmatpush1.msra.mxu0 0.0
    %193 = vmatprep.subr.mxu0 0.0
    %194 = vmatpush1.msra.mxu0 0.0
    %195 = vmatprep.subr.mxu0 0.0
    %196 = vmatpush1.msra.mxu0 0.0
    %197 = vmatprep.subr.mxu0 0.0
    %198 = vmatpush1.msra.mxu0 0.0
    %199 = vmatprep.subr.mxu0 0.0
    %200 = vmatpush1.msra.mxu0 0.0
    %201 = vmatprep.subr.mxu0 0.0
    %202 = vmatpush1.msra.mxu0 0.0
    %203 = vmatprep.subr.mxu0 0.0
    %204 = vmatpush1.msra.mxu0 0.0
    %205 = vmatprep.subr.mxu0 0.0
    %206 = vmatpush1.msra.mxu0 0.0
    %207 = vmatprep.subr.mxu0 0.0
    %208 = vmatpush1.msra.mxu0 0.0
    %209 = vmatprep.subr.mxu0 0.0
    %210 = vmatpush1.msra.mxu0 0.0
    %211 = vmatprep.subr.mxu0 0.0
    %212 = vmatpush1.msra.mxu0 0.0
    %213 = vmatprep.subr.mxu0 0.0
    %214 = vmatpush1.msra.mxu0 0.0
    %215 = vmatprep.mubr.f32.mxu0 0.0
    %216 = vmatmul.mubr.f32.gmra.mrb[0].mxu0 %v146
    %v217 = vpop.f32.mrb[0].mxu0
    %v218 = vadd.f32 0.0, %v217
    %v219 = vpop.f32.mrb[0].mxu0
    %220 = vmatprep.mubr.f32.mxu0 0.0
    %221 = vmatmul.mubr.f32.gmra.mrb[0].mxu0 %v149
    %v222 = vpop.f32.mrb[0].mxu0
    %v223 = vadd.f32 0.0, %v222
    %v224 = vpop.f32.mrb[0].mxu0
    %225 = vdwg.mxu0
    %v226 = vadd.f32 %v134, %v218
    %v227 = vadd.f32 %v135, %v223
    %228 = vst.msk [vmem:[#allocation2] sm:$0xff] %vm28, %v226
    %229 = vst.msk [vmem:[#allocation2 + $0x8] sm:$0xff] %vm28, %v227
    // Predicated region
    $region18: #{llama_mlp.1} parent=1 // pred_check
      %p230 = pneg %p15
    $region19: #{llama_mlp.1} parent=1 // pred_check_branch
      %232 = sbr.rel (%p230) target = $region21
    $region20: #{llama_mlp.1} parent=1 // pred_region
      %v233 = vld [vmem:[#allocation2] sm:$0xff]
      %v234 = vld [vmem:[#allocation2 + $0x8] sm:$0xff]
      %235 = vst.msk [vmem:[#allocation3] sm:$0xff] %vm28, %v233
      %236 = vst.msk [vmem:[#allocation3 + $0x8] sm:$0xff] %vm28, %v234
    $region21: #{llama_mlp.1} parent=1 // pred_fallthru
      _
    // Predicated region
    $region22: #{llama_mlp.1} parent=1 // pred_check
      _
    $region23: #{llama_mlp.1} parent=1 // pred_check_branch
      %238 = sbr.rel (0) target = $region25
    $region24: #{llama_mlp.1} parent=1 // pred_region
      %s240 = ssub.s32 256, 256
      %241 = vsyncadd [#allocation4], %s240
      %s242 = sshll.u32 [#allocation3], 4
      %s243 = int_to_ptr.vmem [resolvable:$true] %s242
      %248 = dma.vmem_to_hbm [thread:$0]  %s243, 256, %s3, [#allocation4], 128, 128, 8
    $region25: #{llama_mlp.1} parent=1 // pred_fallthru
      _
    // Predicated region
    $region26: #{llama_mlp.1} parent=1 // pred_check
      _
    $region27: #{llama_mlp.1} parent=1 // pred_check_branch
      %250 = sbr.rel (0) target = $region29
    $region28: #{llama_mlp.1} parent=1 // pred_region
      %251 = dma.done [#allocation4], 256
    $region29: #{llama_mlp.1} parent=1 // pred_fallthru
      _
    %252 = vsyncpa [#allocation4], 1

</llo_original>
